<compile_context>
chip_gen: v7x
topology: tpu7x:2x2x1
jax: 0.10.0
libtpu: 0.0.40
codegen_flags: <defaults>
</compile_context>

<pallas_src>
import functools

import jax
import jax.numpy as jnp
from jax import lax
from jax.experimental import pallas as pl
from jax.experimental.pallas import tpu as pltpu


def _round_up(x, m):
    return ((x + m - 1) // m) * m


# ---------------------------------------------------------------------------
# Fused kernel: phase 0 = matmul + bias + BN statistics (+ VMEM cache of y),
#               phase 1 = scale/shift + ReLU from the VMEM cache.
# ---------------------------------------------------------------------------
def _make_kernel(m_total, n_pad, n_tiles, eps):
    inv_m = 1.0 / float(m_total)
    n_pad_f = float(n_pad)
    eps_f = float(eps)

    def kernel(w_ref, p_ref, b_ref, g_ref, be_ref, o_ref,
               y_cache, s1_ref, s2_ref, sc_ref, sh_ref):
        ph = pl.program_id(0)   # 0 = stats phase, 1 = write phase
        i = pl.program_id(1)    # M-tile index

        @pl.when(ph == 0)
        def _stats_phase():
            @pl.when(i == 0)
            def _init():
                s1_ref[...] = jnp.zeros_like(s1_ref)
                s2_ref[...] = jnp.zeros_like(s2_ref)

            # (C_pad, K_pad) @ (K_pad, m_tile) -> (C_pad, m_tile), f32 acc.
            y = jnp.dot(w_ref[...], p_ref[...],
                        preferred_element_type=jnp.float32)
            y = y + b_ref[...]                      # bias broadcast over lanes
            y_cache[i] = y                          # keep pre-BN tile in VMEM

            # Single-pass per-channel partial statistics (XLU lane reduce).
            s1_ref[...] += jnp.sum(y, axis=1, keepdims=True)
            s2_ref[...] += jnp.sum(y * y, axis=1, keepdims=True)

            @pl.when(i == n_tiles - 1)
            def _finalize():
                b = b_ref[...]
                # Padded patch columns are exactly zero -> their y == bias.
                mean = (s1_ref[...] - n_pad_f * b) * inv_m
                ex2 = (s2_ref[...] - n_pad_f * b * b) * inv_m
                var = jnp.maximum(ex2 - mean * mean, 0.0)   # biased, clamped
                scale = g_ref[...] * lax.rsqrt(var + eps_f)
                sc_ref[...] = scale
                sh_ref[...] = be_ref[...] - mean * scale

        @pl.when(ph == 1)
        def _write_phase():
            y = y_cache[i]
            o_ref[...] = jnp.maximum(y * sc_ref[...] + sh_ref[...], 0.0)

    return kernel


def conv_trans_m_forward(x, w_ct, bias, gamma, beta, *, stride, padding,
                         eps=1e-5, m_tile=512, matmul_dtype=jnp.bfloat16):
    """ConvTransM forward.  x: (N, Cin, H, W) f32.  Returns (N, Cout, Ho, Wo)."""
    N, Cin, H, W = x.shape
    Cin_w, Cout, kH, kW = w_ct.shape
    assert Cin_w == Cin
    s, p = stride, padding
    Ho = (H - 1) * s - 2 * p + kH
    Wo = (W - 1) * s - 2 * p + kW
    M = N * Ho * Wo
    K = Cin * kH * kW

    # --- im2col in ONE fused XLA op (zero-insert + pad + patch gather) -------
    # patches[n, ci*kH*kW + kh*kW + kw, ho, wo] = dilate(x)[n, ci, ho+kh, wo+kw]
    patches = lax.conv_general_dilated_patches(
        x, (kH, kW), (1, 1),
        padding=[(kH - 1 - p, kH - 1 - p), (kW - 1 - p, kW - 1 - p)],
        lhs_dilation=(s, s),
        dimension_numbers=("NCHW", "OIHW", "NCHW"))        # (N, K, Ho, Wo)
    # Lane-dense layout: K on sublanes, M = N*Ho*Wo on lanes.
    patches_t = jnp.transpose(patches, (1, 0, 2, 3)).reshape(K, M)

    # Equivalent stride-1 conv weight: flip spatially, swap in/out channels.
    # K ordering (ci, kh, kw) matches conv_general_dilated_patches.
    w2 = jnp.transpose(w_ct[:, :, ::-1, ::-1], (1, 0, 2, 3)).reshape(Cout, K)

    # --- TPU-friendly padding -------------------------------------------------
    C_pad = _round_up(Cout, 8)      # sublane dim of out (dense: 8 for Cout=8)
    K_pad = _round_up(K, 16)        # sublane dim of patches (bf16 packing)
    m_tile = max(128, min(m_tile, _round_up(M, 128)))
    M_pad = _round_up(M, m_tile)    # lane dim, tiled
    n_tiles = M_pad // m_tile
    n_pad = M_pad - M

    # Pre-BN activations are cached in VMEM between the two phases.
    y_cache_bytes = n_tiles * C_pad * m_tile * 4
    # TODO(synk): for very large N*Ho*Wo spill the y cache to HBM (two-pass
    # variant); not needed for this module's decoder-scale feature maps.
    assert y_cache_bytes <= 48 * 1024 * 1024, (
        "pre-BN activation cache exceeds VMEM budget; reduce batch/spatial size")

    p_p = jnp.pad(patches_t, ((0, K_pad - K), (0, n_pad))).astype(matmul_dtype)
    w_p = jnp.pad(w2, ((0, C_pad - Cout), (0, K_pad - K))).astype(matmul_dtype)
    b_p = jnp.pad(bias.astype(jnp.float32), (0, C_pad - Cout)).reshape(C_pad, 1)
    g_p = jnp.pad(gamma.astype(jnp.float32), (0, C_pad - Cout)).reshape(C_pad, 1)
    be_p = jnp.pad(beta.astype(jnp.float32), (0, C_pad - Cout)).reshape(C_pad, 1)

    kernel = _make_kernel(M, n_pad, n_tiles, eps)

    itemsize = jnp.dtype(matmul_dtype).itemsize
    cost = pl.CostEstimate(
        flops=2 * C_pad * K_pad * M_pad + 6 * C_pad * M_pad,
        transcendentals=0,
        bytes_accessed=(K_pad * M_pad * itemsize + C_pad * K_pad * itemsize
                        + C_pad * M_pad * 4))

    out_flat = pl.pallas_call(
        kernel,
        out_shape=jax.ShapeDtypeStruct((C_pad, M_pad), jnp.float32),
        grid=(2, n_tiles),
        in_specs=[
            # weights stay resident in VMEM across the whole grid
            pl.BlockSpec((C_pad, K_pad), lambda ph, i: (0, 0)),
            # patch tiles: walk over M in phase 0; pinned to the last tile in
            # phase 1 so no block is ever re-fetched from HBM.
            pl.BlockSpec((K_pad, m_tile),
                         lambda ph, i: (0, i * (1 - ph) + (n_tiles - 1) * ph)),
            pl.BlockSpec((C_pad, 1), lambda ph, i: (0, 0)),   # bias
            pl.BlockSpec((C_pad, 1), lambda ph, i: (0, 0)),   # gamma
            pl.BlockSpec((C_pad, 1), lambda ph, i: (0, 0)),   # beta
        ],
        # output pinned to block 0 during phase 0 (never written back before
        # phase 1 overwrites it), walks over M in phase 1.
        out_specs=pl.BlockSpec((C_pad, m_tile), lambda ph, i: (0, i * ph)),
        scratch_shapes=[
            pltpu.VMEM((n_tiles, C_pad, m_tile), jnp.float32),  # pre-BN y cache
            pltpu.VMEM((C_pad, 1), jnp.float32),                # sum
            pltpu.VMEM((C_pad, 1), jnp.float32),                # sum of squares
            pltpu.VMEM((C_pad, 1), jnp.float32),                # BN scale
            pltpu.VMEM((C_pad, 1), jnp.float32),                # BN shift
        ],
        compiler_params=pltpu.CompilerParams(
            dimension_semantics=("arbitrary", "arbitrary"),
            vmem_limit_bytes=int(min(100 << 20,
                                     max(32 << 20, y_cache_bytes + (8 << 20))))),
        cost_estimate=cost,
    )(w_p, p_p, b_p, g_p, be_p)

    # --- unpack lane-dense (Cout, M) slab back to NCHW -------------------------
    out = out_flat[:Cout, :M].reshape(Cout, N, Ho, Wo)
    return jnp.transpose(out, (1, 0, 2, 3))


# ---------------------------------------------------------------------------
# Pure-JAX f32 reference (XLA dilated conv path) for sanity checking.
# ---------------------------------------------------------------------------
def _reference(x, w_ct, bias, gamma, beta, *, stride, padding, eps=1e-5):
    kH, kW = w_ct.shape[2], w_ct.shape[3]
    s, p = stride, padding
    w_equiv = jnp.transpose(w_ct, (1, 0, 2, 3))[:, :, ::-1, ::-1]  # OIHW
    y = lax.conv_general_dilated(
        x, w_equiv, window_strides=(1, 1),
        padding=[(kH - 1 - p, kH - 1 - p), (kW - 1 - p, kW - 1 - p)],
        lhs_dilation=(s, s),
        dimension_numbers=("NCHW", "OIHW", "NCHW"),
        precision=lax.Precision.HIGHEST)
    y = y + bias[None, :, None, None]
    mean = jnp.mean(y, axis=(0, 2, 3), keepdims=True)
    var = jnp.mean((y - mean) ** 2, axis=(0, 2, 3), keepdims=True)
    y = gamma[None, :, None, None] * (y - mean) * lax.rsqrt(var + eps) \
        + beta[None, :, None, None]
    return jnp.maximum(y, 0.0)


if __name__ == "__main__":
    # Module config: ConvTransM(in_channels=4, out_channels=8, kernel_size=3,
    #                           stride=2, padding=1)
    in_channels, out_channels = 4, 8
    kernel_size, stride, padding = 3, 2, 1
    N, H, W = 2, 16, 16

    key = jax.random.PRNGKey(0)
    kx, kw, kb = jax.random.split(key, 3)

    x = jax.random.normal(kx, (N, in_channels, H, W), jnp.float32)
    # ConvTranspose2d weight layout: (in_channels, out_channels, kH, kW)
    w_ct = 0.1 * jax.random.normal(
        kw, (in_channels, out_channels, kernel_size, kernel_size), jnp.float32)
    bias = 0.1 * jax.random.normal(kb, (out_channels,), jnp.float32)
    # BatchNorm2d fresh-module init (train-mode batch stats): weight=1, bias=0.
    gamma = jnp.ones((out_channels,), jnp.float32)
    beta = jnp.zeros((out_channels,), jnp.float32)

    fwd = jax.jit(functools.partial(conv_trans_m_forward,
                                    stride=stride, padding=padding))
    out = fwd(x, w_ct, bias, gamma, beta)
    out = jax.block_until_ready(out)

    ref = _reference(x, w_ct, bias, gamma, beta, stride=stride, padding=padding)
    Ho = (H - 1) * stride - 2 * padding + kernel_size
    Wo = (W - 1) * stride - 2 * padding + kernel_size
    assert out.shape == (N, out_channels, Ho, Wo), out.shape
    # bf16 MXU inputs (f32 accumulation) -> loosened tolerance vs f32 reference.
    assert jnp.allclose(out, ref, atol=5e-2, rtol=5e-2), \
        float(jnp.max(jnp.abs(out - ref)))

    print("KERNEL_OK")
</pallas_src>

<mosaic_0001>
module attributes {stable_mosaic.version = 11 : i64} {
  func.func @kernel(%arg0: i32, %arg1: i32, %arg2: memref<8x48xbf16, #tpu.memory_space<vmem>>, %arg3: memref<48x512xbf16, #tpu.memory_space<vmem>>, %arg4: memref<8x1xf32, #tpu.memory_space<vmem>>, %arg5: memref<8x1xf32, #tpu.memory_space<vmem>>, %arg6: memref<8x1xf32, #tpu.memory_space<vmem>>, %arg7: memref<8x512xf32, #tpu.memory_space<vmem>>, %arg8: memref<4x8x512xf32, #tpu.memory_space<vmem>>, %arg9: memref<8x1xf32, #tpu.memory_space<vmem>>, %arg10: memref<8x1xf32, #tpu.memory_space<vmem>>, %arg11: memref<8x1xf32, #tpu.memory_space<vmem>>, %arg12: memref<8x1xf32, #tpu.memory_space<vmem>>) attributes {dimension_semantics = [#tpu.dimension_semantics<arbitrary>, #tpu.dimension_semantics<arbitrary>], iteration_bounds = array<i64: 2, 4>, scalar_prefetch = 0 : i64, scratch_operands = 5 : i64, tpu.core_type = #tpu.core_type<tc>, window_params = [{pipeline_mode = #tpu.pipeline_mode<synchronous>, transform_indices = @transform_0, window_bounds = array<i64: 8, 48>}, {transform_indices = @transform_1, window_bounds = array<i64: 48, 512>}, {pipeline_mode = #tpu.pipeline_mode<synchronous>, transform_indices = @transform_2, window_bounds = array<i64: 8, 1>}, {pipeline_mode = #tpu.pipeline_mode<synchronous>, transform_indices = @transform_3, window_bounds = array<i64: 8, 1>}, {pipeline_mode = #tpu.pipeline_mode<synchronous>, transform_indices = @transform_4, window_bounds = array<i64: 8, 1>}, {transform_indices = @transform_5, window_bounds = array<i64: 8, 512>}]} {
    %c0_i32 = arith.constant 0 : i32
    %0 = arith.cmpi eq, %arg0, %c0_i32 : i32
    %1 = arith.extui %0 : i1 to i32
    %c0_i32_0 = arith.constant 0 : i32
    %2 = arith.cmpi ne, %1, %c0_i32_0 : i32
    scf.if %2 {
      %c0_i32_2 = arith.constant 0 : i32
      %6 = arith.cmpi eq, %arg1, %c0_i32_2 : i32
      %7 = arith.extui %6 : i1 to i32
      %c0_i32_3 = arith.constant 0 : i32
      %8 = arith.cmpi ne, %7, %c0_i32_3 : i32
      scf.if %8 {
        %cst_22 = arith.constant 0.000000e+00 : f32
        %33 = vector.broadcast %cst_22 : f32 to vector<8x1xf32>
        %c0_23 = arith.constant 0 : index
        %c0_24 = arith.constant 0 : index
        %34 = vector.load %arg9[%c0_23, %c0_24] : memref<8x1xf32, #tpu.memory_space<vmem>>, vector<8x1xf32>
        tpu.vector_store %arg9[%c0_23, %c0_24], %33 {strides = array<i32>} : memref<8x1xf32, #tpu.memory_space<vmem>>, vector<8x1xf32>,
        %cst_25 = arith.constant 0.000000e+00 : f32
        %35 = vector.broadcast %cst_25 : f32 to vector<8x1xf32>
        %c0_26 = arith.constant 0 : index
        %c0_27 = arith.constant 0 : index
        %36 = vector.load %arg10[%c0_26, %c0_27] : memref<8x1xf32, #tpu.memory_space<vmem>>, vector<8x1xf32>
        tpu.vector_store %arg10[%c0_26, %c0_27], %35 {strides = array<i32>} : memref<8x1xf32, #tpu.memory_space<vmem>>, vector<8x1xf32>,
      } else {
      }
      %c0 = arith.constant 0 : index
      %c0_4 = arith.constant 0 : index
      %9 = vector.load %arg2[%c0, %c0_4] : memref<8x48xbf16, #tpu.memory_space<vmem>>, vector<8x48xbf16>
      %c0_5 = arith.constant 0 : index
      %c0_6 = arith.constant 0 : index
      %10 = vector.load %arg3[%c0_5, %c0_6] : memref<48x512xbf16, #tpu.memory_space<vmem>>, vector<48x512xbf16>
      %cst = arith.constant dense<0.000000e+00> : vector<8x512xf32>
      %11 = tpu.matmul %9, %10, %cst {dimension_numbers = #tpu.dot_dimension_numbers<[1], [0], [0], [1], [0, 0, 1, 1], [], []>} : vector<8x48xbf16>, vector<48x512xbf16>, vector<8x512xf32> -> vector<8x512xf32>
      %c0_7 = arith.constant 0 : index
      %c0_8 = arith.constant 0 : index
      %12 = vector.load %arg4[%c0_7, %c0_8] : memref<8x1xf32, #tpu.memory_space<vmem>>, vector<8x1xf32>
      %13 = vector.broadcast %12 : vector<8x1xf32> to vector<8x512xf32>
      %14 = arith.addf %11, %13 : vector<8x512xf32>
      %15 = arith.index_cast %arg1 : i32 to index
      %c0_9 = arith.constant 0 : index
      %c0_10 = arith.constant 0 : index
      %16 = vector.load %arg8[%15, %c0_9, %c0_10] : memref<4x8x512xf32, #tpu.memory_space<vmem>>, vector<1x8x512xf32>
      %17 = vector.shape_cast %16 : vector<1x8x512xf32> to vector<8x512xf32>
      %18 = vector.shape_cast %14 : vector<8x512xf32> to vector<1x8x512xf32>
      tpu.vector_store %arg8[%15, %c0_9, %c0_10], %18 {strides = array<i32>} : memref<4x8x512xf32, #tpu.memory_space<vmem>>, vector<1x8x512xf32>,
      %c0_11 = arith.constant 0 : index
      %c0_12 = arith.constant 0 : index
      %19 = vector.load %arg9[%c0_11, %c0_12] : memref<8x1xf32, #tpu.memory_space<vmem>>, vector<8x1xf32>
      %cst_13 = arith.constant dense<0.000000e+00> : vector<8xf32>
      %20 = vector.multi_reduction <add>, %14, %cst_13 [1] : vector<8x512xf32> to vector<8xf32>
      %21 = vector.shape_cast %20 : vector<8xf32> to vector<8x1xf32>
      %22 = arith.addf %19, %21 : vector<8x1xf32>
      %c0_14 = arith.constant 0 : index
      %c0_15 = arith.constant 0 : index
      %23 = vector.load %arg9[%c0_14, %c0_15] : memref<8x1xf32, #tpu.memory_space<vmem>>, vector<8x1xf32>
      tpu.vector_store %arg9[%c0_14, %c0_15], %22 {strides = array<i32>} : memref<8x1xf32, #tpu.memory_space<vmem>>, vector<8x1xf32>,
      %c0_16 = arith.constant 0 : index
      %c0_17 = arith.constant 0 : index
      %24 = vector.load %arg10[%c0_16, %c0_17] : memref<8x1xf32, #tpu.memory_space<vmem>>, vector<8x1xf32>
      %25 = arith.mulf %14, %14 : vector<8x512xf32>
      %cst_18 = arith.constant dense<0.000000e+00> : vector<8xf32>
      %26 = vector.multi_reduction <add>, %25, %cst_18 [1] : vector<8x512xf32> to vector<8xf32>
      %27 = vector.shape_cast %26 : vector<8xf32> to vector<8x1xf32>
      %28 = arith.addf %24, %27 : vector<8x1xf32>
      %c0_19 = arith.constant 0 : index
      %c0_20 = arith.constant 0 : index
      %29 = vector.load %arg10[%c0_19, %c0_20] : memref<8x1xf32, #tpu.memory_space<vmem>>, vector<8x1xf32>
      tpu.vector_store %arg10[%c0_19, %c0_20], %28 {strides = array<i32>} : memref<8x1xf32, #tpu.memory_space<vmem>>, vector<8x1xf32>,
      %c3_i32 = arith.constant 3 : i32
      %30 = arith.cmpi eq, %arg1, %c3_i32 : i32
      %31 = arith.extui %30 : i1 to i32
      %c0_i32_21 = arith.constant 0 : i32
      %32 = arith.cmpi ne, %31, %c0_i32_21 : i32
      scf.if %32 {
        %c0_22 = arith.constant 0 : index
        %c0_23 = arith.constant 0 : index
        %33 = vector.load %arg4[%c0_22, %c0_23] : memref<8x1xf32, #tpu.memory_space<vmem>>, vector<8x1xf32>
        %c0_24 = arith.constant 0 : index
        %c0_25 = arith.constant 0 : index
        %34 = vector.load %arg9[%c0_24, %c0_25] : memref<8x1xf32, #tpu.memory_space<vmem>>, vector<8x1xf32>
        %cst_26 = arith.constant 1.260000e+02 : f32
        %35 = vector.broadcast %cst_26 : f32 to vector<8x1xf32>
        %36 = arith.mulf %35, %33 : vector<8x1xf32>
        %37 = arith.subf %34, %36 : vector<8x1xf32>
        %cst_27 = arith.constant 5.20291389E-4 : f32
        %38 = vector.broadcast %cst_27 : f32 to vector<8x1xf32>
        %39 = arith.mulf %37, %38 : vector<8x1xf32>
        %c0_28 = arith.constant 0 : index
        %c0_29 = arith.constant 0 : index
        %40 = vector.load %arg10[%c0_28, %c0_29] : memref<8x1xf32, #tpu.memory_space<vmem>>, vector<8x1xf32>
        %cst_30 = arith.constant 1.260000e+02 : f32
        %41 = vector.broadcast %cst_30 : f32 to vector<8x1xf32>
        %42 = arith.mulf %41, %33 : vector<8x1xf32>
        %43 = arith.mulf %42, %33 : vector<8x1xf32>
        %44 = arith.subf %40, %43 : vector<8x1xf32>
        %cst_31 = arith.constant 5.20291389E-4 : f32
        %45 = vector.broadcast %cst_31 : f32 to vector<8x1xf32>
        %46 = arith.mulf %44, %45 : vector<8x1xf32>
        %47 = arith.mulf %39, %39 : vector<8x1xf32>
        %48 = arith.subf %46, %47 : vector<8x1xf32>
        %cst_32 = arith.constant 0.000000e+00 : f32
        %49 = vector.broadcast %cst_32 : f32 to vector<8x1xf32>
        %50 = arith.maximumf %48, %49 : vector<8x1xf32>
        %c0_33 = arith.constant 0 : index
        %c0_34 = arith.constant 0 : index
        %51 = vector.load %arg5[%c0_33, %c0_34] : memref<8x1xf32, #tpu.memory_space<vmem>>, vector<8x1xf32>
        %cst_35 = arith.constant 9.99999974E-6 : f32
        %52 = vector.broadcast %cst_35 : f32 to vector<8x1xf32>
        %53 = arith.addf %50, %52 : vector<8x1xf32>
        %54 = math.rsqrt %53 : vector<8x1xf32>
        %55 = arith.mulf %51, %54 : vector<8x1xf32>
        %c0_36 = arith.constant 0 : index
        %c0_37 = arith.constant 0 : index
        %56 = vector.load %arg11[%c0_36, %c0_37] : memref<8x1xf32, #tpu.memory_space<vmem>>, vector<8x1xf32>
        tpu.vector_store %arg11[%c0_36, %c0_37], %55 {strides = array<i32>} : memref<8x1xf32, #tpu.memory_space<vmem>>, vector<8x1xf32>,
        %c0_38 = arith.constant 0 : index
        %c0_39 = arith.constant 0 : index
        %57 = vector.load %arg6[%c0_38, %c0_39] : memref<8x1xf32, #tpu.memory_space<vmem>>, vector<8x1xf32>
        %58 = arith.mulf %39, %55 : vector<8x1xf32>
        %59 = arith.subf %57, %58 : vector<8x1xf32>
        %c0_40 = arith.constant 0 : index
        %c0_41 = arith.constant 0 : index
        %60 = vector.load %arg12[%c0_40, %c0_41] : memref<8x1xf32, #tpu.memory_space<vmem>>, vector<8x1xf32>
        tpu.vector_store %arg12[%c0_40, %c0_41], %59 {strides = array<i32>} : memref<8x1xf32, #tpu.memory_space<vmem>>, vector<8x1xf32>,
      } else {
      }
    } else {
    }
    %c1_i32 = arith.constant 1 : i32
    %3 = arith.cmpi eq, %arg0, %c1_i32 : i32
    %4 = arith.extui %3 : i1 to i32
    %c0_i32_1 = arith.constant 0 : i32
    %5 = arith.cmpi ne, %4, %c0_i32_1 : i32
    scf.if %5 {
      %6 = arith.index_cast %arg1 : i32 to index
      %c0 = arith.constant 0 : index
      %c0_2 = arith.constant 0 : index
      %7 = vector.load %arg8[%6, %c0, %c0_2] : memref<4x8x512xf32, #tpu.memory_space<vmem>>, vector<1x8x512xf32>
      %8 = vector.shape_cast %7 : vector<1x8x512xf32> to vector<8x512xf32>
      %c0_3 = arith.constant 0 : index
      %c0_4 = arith.constant 0 : index
      %9 = vector.load %arg11[%c0_3, %c0_4] : memref<8x1xf32, #tpu.memory_space<vmem>>, vector<8x1xf32>
      %10 = vector.broadcast %9 : vector<8x1xf32> to vector<8x512xf32>
      %11 = arith.mulf %8, %10 : vector<8x512xf32>
      %c0_5 = arith.constant 0 : index
      %c0_6 = arith.constant 0 : index
      %12 = vector.load %arg12[%c0_5, %c0_6] : memref<8x1xf32, #tpu.memory_space<vmem>>, vector<8x1xf32>
      %13 = vector.broadcast %12 : vector<8x1xf32> to vector<8x512xf32>
      %14 = arith.addf %11, %13 : vector<8x512xf32>
      %cst = arith.constant 0.000000e+00 : f32
      %15 = vector.broadcast %cst : f32 to vector<8x512xf32>
      %16 = arith.maximumf %14, %15 : vector<8x512xf32>
      %c0_7 = arith.constant 0 : index
      %c0_8 = arith.constant 0 : index
      %17 = vector.load %arg7[%c0_7, %c0_8] : memref<8x512xf32, #tpu.memory_space<vmem>>, vector<8x512xf32>
      tpu.vector_store %arg7[%c0_7, %c0_8], %16 {strides = array<i32>} : memref<8x512xf32, #tpu.memory_space<vmem>>, vector<8x512xf32>,
    } else {
    }
    return
  }
  func.func @transform_0(%arg0: i32, %arg1: i32) -> (i32, i32) {
    %c0_i32 = arith.constant 0 : i32
    %c0_i32_0 = arith.constant 0 : i32
    %c0_i32_1 = arith.constant 0 : i32
    return %c0_i32, %c0_i32_0 : i32, i32
  }
  func.func @transform_1(%arg0: i32, %arg1: i32) -> (i32, i32) {
    %c1_i32 = arith.constant 1 : i32
    %0 = arith.subi %c1_i32, %arg0 : i32
    %1 = arith.muli %arg1, %0 : i32
    %c3_i32 = arith.constant 3 : i32
    %2 = arith.muli %c3_i32, %arg0 : i32
    %3 = arith.addi %1, %2 : i32
    %c0_i32 = arith.constant 0 : i32
    %c0_i32_0 = arith.constant 0 : i32
    return %c0_i32, %3 : i32, i32
  }
  func.func @transform_2(%arg0: i32, %arg1: i32) -> (i32, i32) {
    %c0_i32 = arith.constant 0 : i32
    %c0_i32_0 = arith.constant 0 : i32
    %c0_i32_1 = arith.constant 0 : i32
    return %c0_i32, %c0_i32_0 : i32, i32
  }
  func.func @transform_3(%arg0: i32, %arg1: i32) -> (i32, i32) {
    %c0_i32 = arith.constant 0 : i32
    %c0_i32_0 = arith.constant 0 : i32
    %c0_i32_1 = arith.constant 0 : i32
    return %c0_i32, %c0_i32_0 : i32, i32
  }
  func.func @transform_4(%arg0: i32, %arg1: i32) -> (i32, i32) {
    %c0_i32 = arith.constant 0 : i32
    %c0_i32_0 = arith.constant 0 : i32
    %c0_i32_1 = arith.constant 0 : i32
    return %c0_i32, %c0_i32_0 : i32, i32
  }
  func.func @transform_5(%arg0: i32, %arg1: i32) -> (i32, i32) {
    %0 = arith.muli %arg1, %arg0 : i32
    %c0_i32 = arith.constant 0 : i32
    %c0_i32_0 = arith.constant 0 : i32
    return %c0_i32, %0 : i32, i32
  }
}

</mosaic_0001>

<llo_original>
// kernel: conv_trans_m_forward.1
$region0: #{conv_trans_m_forward.1}
  #allocation0 [shape = 'u32[]', space=smem, size = 0x4, offset = 0x4, fixed_abs, tag = 'smem constant byte address 0x4 - core index']
  #allocation1 [shape = 'u32[144,128]{1,0:T(1,128)}', space=vmem, size = 0x12000, scoped, tag = 'internal scratch']
  #allocation2 [shape = 'f32[4,8,512]{2,1,0:T(8,128)}', space=vmem, size = 0x10000, scoped, tag = 'scratch operand']
  #allocation3 [shape = 'f32[8,1]{1,0:T(8,128)}', space=vmem, size = 0x1000, scoped, tag = 'scratch operand']
  #allocation4 [shape = 'f32[8,1]{1,0:T(8,128)}', space=vmem, size = 0x1000, scoped, tag = 'scratch operand']
  #allocation5 [shape = 'f32[8,1]{1,0:T(8,128)}', space=vmem, size = 0x1000, scoped, tag = 'scratch operand']
  #allocation6 [shape = 'f32[8,1]{1,0:T(8,128)}', space=vmem, size = 0x1000, scoped, tag = 'scratch operand']
  %s0 = inlined_call_operand.vmem [shape: bf16[8,48], index: 0, kind: input, shape index: {}]
  %s1 = inlined_call_operand.vmem [shape: bf16[48,2048], index: 1, kind: input, shape index: {}]
  %s2 = inlined_call_operand.vmem [shape: f32[8,1], index: 2, kind: input, shape index: {}]
  %s3 = inlined_call_operand.vmem [shape: f32[8,1], index: 3, kind: input, shape index: {}]
  %s4 = inlined_call_operand.vmem [shape: f32[8,1], index: 4, kind: input, shape index: {}]
  %s5 = inlined_call_operand.vmem [shape: f32[8,2048], index: 5, kind: output, shape index: {}]
  %s6 = sld [smem:[#allocation0]]
  $region92: #{conv_trans_m_forward.1} parent=0
    _
  %s8 = ssub.s32 1, %s6
  %s9 = scalar_select 0, %s8, %s6
  $region1: #{conv_trans_m_forward.1} parent=0
    #allocation7 [shape = 'u8[98304]{0}', space=vmem, size = 0x18000, scoped, tag = 'input window, operand 1']
    loop: start=0, step=1, limit=10
    $region2: #{conv_trans_m_forward.1} parent=1 // loop_pre_header
      _
    $region3: #{conv_trans_m_forward.1} parent=1 // loop_header
      %s11 = sphi 0, %s15
      %p12 = scmp.ge.s32.totalorder %s11, 10
      %s18 = sphi 0, %s30
      %s19 = sphi 0, %s26
      %s20 = sphi 0, %s18
      %s21 = sphi 0, %s19
      %s22 = sphi 0, %s20
      %s23 = sphi 0, %s21
      %s31 = sphi 0, %s31
      %s33 = sphi 0, %s31
      %s34 = sphi 0, %s33
      %s48 = sphi 0, %s34
      %s62 = sphi 0, %s64
      %s65 = sphi 0, %s62
      %s66 = sphi 0, %s65
      %s82 = sphi 0, %s66
      %s86 = sphi 0, %s86
      %s88 = sphi 0, %s86
      %s89 = sphi 0, %s88
      %s103 = sphi 0, %s89
      %s107 = sphi 0, %s107
      %s109 = sphi 0, %s107
      %s110 = sphi 0, %s109
      %s124 = sphi 0, %s110
      %s128 = sphi 0, %s128
      %s130 = sphi 0, %s128
      %s131 = sphi 0, %s130
      %s145 = sphi 0, %s131
      %s153 = sphi 0, %s155
      %s156 = sphi 0, %s153
      %s157 = sphi 0, %s156
      %s173 = sphi 0, %s157
    $region4: #{conv_trans_m_forward.1} parent=1 // loop_header_branch
      %14 = sbr.rel (%p12) target = $region8
    $region5: #{conv_trans_m_forward.1} parent=1 // loop_body
      %s16 = ssub.s32 %s11, 1
      %s17 = ssub.s32 %s11, 2
      %s24 = sadd.s32 1, %s19
      %p25 = scmp.ge.s32.totalorder %s24, 4
      %s26 = scalar_select %p25, 0, %s24
      %s27 = sadd.s32 1, %s18
      %s28 = scalar_select %p25, %s27, %s18
      %p29 = scmp.ge.s32.totalorder %s28, 2
      %s30 = scalar_select %p29, 0, %s28
      %s32 = sadd.s32 %s31, 1
      %p35 = scmp.eq.s32.totalorder %s11, 7
      %p36 = scmp.ne.s32.totalorder %s31, %s33
      %p37 = scmp.eq.s32.totalorder %s11, 0
      %p38 = por %p36, %p37
      %p39 = scmp.ne.s32.totalorder %s31, %s33
      %p40 = scmp.eq.s32.totalorder %s16, 7
      %p41 = por %p39, %p40
      %p42 = scmp.ne.s32.totalorder %s33, %s34
      %p43 = scmp.eq.s32.totalorder %s16, 0
      %p44 = por %p42, %p43
      %p45 = scmp.ne.s32.totalorder %s33, %s34
      %p46 = scmp.eq.s32.totalorder %s17, 7
      %p47 = por %p45, %p46
      %p49 = scmp.ne.s32.totalorder %s34, %s48
      %p50 = scmp.eq.s32.totalorder %s17, 0
      %p51 = por %p49, %p50
      %s52 = ssub.s32 1, %s18
      %s53 = smul.u32 %s19, %s52
      %s54 = smul.u32 %s18, 3
      %s55 = sadd.s32 %s53, %s54
      %s56 = ssub.s32 1, %s30
      %s57 = smul.u32 %s26, %s56
      %s58 = smul.u32 %s30, 3
      %s59 = sadd.s32 %s57, %s58
      %s60 = ssub.s32 %s55, %s59
      %p61 = scmp.eq.s32.totalorder %s60, 0
      %s63 = sadd.s32 %s62, 1
      %s64 = scalar_select %p61, %s62, %s63
      %p67 = pneg %p61
      %p68 = scmp.eq.s32.totalorder %s11, 7
      %p69 = por %p67, %p68
      %p70 = scmp.ne.s32.totalorder %s62, %s65
      %p71 = scmp.eq.s32.totalorder %s11, 0
      %p72 = por %p70, %p71
      %p73 = scmp.ne.s32.totalorder %s62, %s65
      %p74 = scmp.eq.s32.totalorder %s16, 7
      %p75 = por %p73, %p74
      %p76 = scmp.ne.s32.totalorder %s65, %s66
      %p77 = scmp.eq.s32.totalorder %s16, 0
      %p78 = por %p76, %p77
      %p79 = scmp.ne.s32.totalorder %s65, %s66
      %p80 = scmp.eq.s32.totalorder %s17, 7
      %p81 = por %p79, %p80
      %p83 = scmp.ne.s32.totalorder %s66, %s82
      %p84 = scmp.eq.s32.totalorder %s17, 0
      %p85 = por %p83, %p84
      %s87 = sadd.s32 %s86, 1
      %p90 = scmp.eq.s32.totalorder %s11, 7
      %p91 = scmp.ne.s32.totalorder %s86, %s88
      %p92 = scmp.eq.s32.totalorder %s11, 0
      %p93 = por %p91, %p92
      %p94 = scmp.ne.s32.totalorder %s86, %s88
      %p95 = scmp.eq.s32.totalorder %s16, 7
      %p96 = por %p94, %p95
      %p97 = scmp.ne.s32.totalorder %s88, %s89
      %p98 = scmp.eq.s32.totalorder %s16, 0
      %p99 = por %p97, %p98
      %p100 = scmp.ne.s32.totalorder %s88, %s89
      %p101 = scmp.eq.s32.totalorder %s17, 7
      %p102 = por %p100, %p101
      %p104 = scmp.ne.s32.totalorder %s89, %s103
      %p105 = scmp.eq.s32.totalorder %s17, 0
      %p106 = por %p104, %p105
      %s108 = sadd.s32 %s107, 1
      %p111 = scmp.eq.s32.totalorder %s11, 7
      %p112 = scmp.ne.s32.totalorder %s107, %s109
      %p113 = scmp.eq.s32.totalorder %s11, 0
      %p114 = por %p112, %p113
      %p115 = scmp.ne.s32.totalorder %s107, %s109
      %p116 = scmp.eq.s32.totalorder %s16, 7
      %p117 = por %p115, %p116
      %p118 = scmp.ne.s32.totalorder %s109, %s110
      %p119 = scmp.eq.s32.totalorder %s16, 0
      %p120 = por %p118, %p119
      %p121 = scmp.ne.s32.totalorder %s109, %s110
      %p122 = scmp.eq.s32.totalorder %s17, 7
      %p123 = por %p121, %p122
      %p125 = scmp.ne.s32.totalorder %s110, %s124
      %p126 = scmp.eq.s32.totalorder %s17, 0
      %p127 = por %p125, %p126
      %s129 = sadd.s32 %s128, 1
      %p132 = scmp.eq.s32.totalorder %s11, 7
      %p133 = scmp.ne.s32.totalorder %s128, %s130
      %p134 = scmp.eq.s32.totalorder %s11, 0
      %p135 = por %p133, %p134
      %p136 = scmp.ne.s32.totalorder %s128, %s130
      %p137 = scmp.eq.s32.totalorder %s16, 7
      %p138 = por %p136, %p137
      %p139 = scmp.ne.s32.totalorder %s130, %s131
      %p140 = scmp.eq.s32.totalorder %s16, 0
      %p141 = por %p139, %p140
      %p142 = scmp.ne.s32.totalorder %s130, %s131
      %p143 = scmp.eq.s32.totalorder %s17, 7
      %p144 = por %p142, %p143
      %p146 = scmp.ne.s32.totalorder %s131, %s145
      %p147 = scmp.eq.s32.totalorder %s17, 0
      %p148 = por %p146, %p147
      %s149 = smul.u32 %s19, %s18
      %s150 = smul.u32 %s26, %s30
      %s151 = ssub.s32 %s149, %s150
      %p152 = scmp.eq.s32.totalorder %s151, 0
      %s154 = sadd.s32 %s153, 1
      %s155 = scalar_select %p152, %s153, %s154
      %p158 = pneg %p152
      %p159 = scmp.eq.s32.totalorder %s11, 7
      %p160 = por %p158, %p159
      %p161 = scmp.ne.s32.totalorder %s153, %s156
      %p162 = scmp.eq.s32.totalorder %s11, 0
      %p163 = por %p161, %p162
      %p164 = scmp.ne.s32.totalorder %s153, %s156
      %p165 = scmp.eq.s32.totalorder %s16, 7
      %p166 = por %p164, %p165
      %p167 = scmp.ne.s32.totalorder %s156, %s157
      %p168 = scmp.eq.s32.totalorder %s16, 0
      %p169 = por %p167, %p168
      %p170 = scmp.ne.s32.totalorder %s156, %s157
      %p171 = scmp.eq.s32.totalorder %s17, 7
      %p172 = por %p170, %p171
      %p174 = scmp.ne.s32.totalorder %s157, %s173
      %p175 = scmp.eq.s32.totalorder %s17, 0
      %p176 = por %p174, %p175
      %p177 = scmp.le.s32.totalorder 1, %s11
      %p178 = scmp.lt.s32.totalorder %s11, 9
      %p179 = pnand %p177, %p178
      %p180 = pneg %p179
      // Predicated region
      $region9: #{conv_trans_m_forward.1} parent=5 // pred_check
        _
      $region10: #{conv_trans_m_forward.1} parent=5 // pred_check_branch
        %182 = sbr.rel (%p179) target = $region12
      $region11: #{conv_trans_m_forward.1} parent=5 // pred_region
        %s183 = ssub.s32 %s11, 1
        // Predicated region
        $region13: #{conv_trans_m_forward.1} parent=11 // pred_check
          %p184 = pneg %p44
        $region14: #{conv_trans_m_forward.1} parent=11 // pred_check_branch
          %186 = sbr.rel (%p184) target = $region16
        $region15: #{conv_trans_m_forward.1} parent=11 // pred_region
          _
        $region16: #{conv_trans_m_forward.1} parent=11 // pred_fallthru
          _
        // Predicated region
        $region17: #{conv_trans_m_forward.1} parent=11 // pred_check
          %p187 = pneg %p99
        $region18: #{conv_trans_m_forward.1} parent=11 // pred_check_branch
          %189 = sbr.rel (%p187) target = $region20
        $region19: #{conv_trans_m_forward.1} parent=11 // pred_region
          _
        $region20: #{conv_trans_m_forward.1} parent=11 // pred_fallthru
          _
        // Predicated region
        $region21: #{conv_trans_m_forward.1} parent=11 // pred_check
          %p190 = pneg %p120
        $region22: #{conv_trans_m_forward.1} parent=11 // pred_check_branch
          %192 = sbr.rel (%p190) target = $region24
        $region23: #{conv_trans_m_forward.1} parent=11 // pred_region
          _
        $region24: #{conv_trans_m_forward.1} parent=11 // pred_fallthru
          _
        // Predicated region
        $region25: #{conv_trans_m_forward.1} parent=11 // pred_check
          %p193 = pneg %p141
        $region26: #{conv_trans_m_forward.1} parent=11 // pred_check_branch
          %195 = sbr.rel (%p193) target = $region28
        $region27: #{conv_trans_m_forward.1} parent=11 // pred_region
          _
        $region28: #{conv_trans_m_forward.1} parent=11 // pred_fallthru
          _
      $region12: #{conv_trans_m_forward.1} parent=5 // pred_fallthru
        _
      %p196 = scmp.lt.s32.totalorder %s11, 8
      // Predicated region
      $region29: #{conv_trans_m_forward.1} parent=5 // pred_check
        %p197 = pneg %p196
      $region30: #{conv_trans_m_forward.1} parent=5 // pred_check_branch
        %199 = sbr.rel (%p197) target = $region32
      $region31: #{conv_trans_m_forward.1} parent=5 // pred_region
        // Predicated region
        $region33: #{conv_trans_m_forward.1} parent=31 // pred_check
          %p200 = pneg %p72
        $region34: #{conv_trans_m_forward.1} parent=31 // pred_check_branch
          %202 = sbr.rel (%p200) target = $region36
        $region35: #{conv_trans_m_forward.1} parent=31 // pred_region
          %s203 = sand.u32 %s62, 1
          %s204 = sand.u32 %s62, 1
          %s205 = smul.addr %s204, 96
          %s206 = scalar_lea.vmem [#allocation7], %s205
          %s207 = ssub.s32 1, %s18
          %s208 = smul.u32 %s19, %s207
          %s209 = smul.u32 %s18, 3
          %s210 = sadd.s32 %s208, %s209
          %s211 = smul.u32 4, %s210
          %s212 = smul.addr %s211, 4
          %s213 = scalar_lea.vmem %s1, %s212
          // Predicated region
          $region37: #{conv_trans_m_forward.1} parent=35 // pred_check
            _
          $region38: #{conv_trans_m_forward.1} parent=35 // pred_check_branch
            %215 = sbr.rel (0) target = $region40
          $region39: #{conv_trans_m_forward.1} parent=35 // pred_region
            // Predicated region
            $region41: #{conv_trans_m_forward.1} parent=39 // pred_check
              _
            $region42: #{conv_trans_m_forward.1} parent=39 // pred_check_branch
              %217 = sbr.rel (0) target = $region44
            $region43: #{conv_trans_m_forward.1} parent=39 // pred_region
              loop: start=0, step=1, limit=1
              $region45: #{conv_trans_m_forward.1} parent=43 // loop_pre_header
                _
              $region46: #{conv_trans_m_forward.1} parent=43 // loop_header
                %s219 = sphi 0, %s223
                %p220 = scmp.ge.s32.totalorder %s219, 1
                %s224 = sphi %s213, %s213
                %s225 = sphi %s206, %s206
              $region47: #{conv_trans_m_forward.1} parent=43 // loop_header_branch
                %222 = sbr.rel (%p220) target = $region51
              $region48: #{conv_trans_m_forward.1} parent=43 // loop_body
                %v226 = vld [vmem:[%s224] sm:$0xff]
                %227 = vst [vmem:[%s225] sm:$0xff] %v226
                %v228 = vld [vmem:[%s224 + $0x8] sm:$0xff]
                %229 = vst [vmem:[%s225 + $0x8] sm:$0xff] %v228
                %v230 = vld [vmem:[%s224 + $0x40] sm:$0xff]
                %231 = vst [vmem:[%s225 + $0x10] sm:$0xff] %v230
                %v232 = vld [vmem:[%s224 + $0x48] sm:$0xff]
                %233 = vst [vmem:[%s225 + $0x18] sm:$0xff] %v232
                %v234 = vld [vmem:[%s224 + $0x80] sm:$0xff]
                %235 = vst [vmem:[%s225 + $0x20] sm:$0xff] %v234
                %v236 = vld [vmem:[%s224 + $0x88] sm:$0xff]
                %237 = vst [vmem:[%s225 + $0x28] sm:$0xff] %v236
                %v238 = vld [vmem:[%s224 + $0xc0] sm:$0xff]
                %239 = vst [vmem:[%s225 + $0x30] sm:$0xff] %v238
                %v240 = vld [vmem:[%s224 + $0xc8] sm:$0xff]
                %241 = vst [vmem:[%s225 + $0x38] sm:$0xff] %v240
                %v242 = vld [vmem:[%s224 + $0x100] sm:$0xff]
                %243 = vst [vmem:[%s225 + $0x40] sm:$0xff] %v242
                %v244 = vld [vmem:[%s224 + $0x108] sm:$0xff]
                %245 = vst [vmem:[%s225 + $0x48] sm:$0xff] %v244
                %v246 = vld [vmem:[%s224 + $0x140] sm:$0xff]
                %247 = vst [vmem:[%s225 + $0x50] sm:$0xff] %v246
                %v248 = vld [vmem:[%s224 + $0x148] sm:$0xff]
                %249 = vst [vmem:[%s225 + $0x58] sm:$0xff] %v248
              $region49: #{conv_trans_m_forward.1} parent=43 // loop_footer
                %s223 = sadd.s32 1, %s219
              $region50: #{conv_trans_m_forward.1} parent=43 // loop_footer_branch
                %218 = sbr.rel target = $region46
              $region51: #{conv_trans_m_forward.1} parent=43 // loop_exit
                _
            $region44: #{conv_trans_m_forward.1} parent=39 // pred_fallthru
              _
            // Predicated region
            $region52: #{conv_trans_m_forward.1} parent=39 // pred_check
              _
            $region53: #{conv_trans_m_forward.1} parent=39 // pred_check_branch
              %251 = sbr.rel target = $region55
            $region54: #{conv_trans_m_forward.1} parent=39 // pred_region
              _
            $region55: #{conv_trans_m_forward.1} parent=39 // pred_fallthru
              _
          $region40: #{conv_trans_m_forward.1} parent=35 // pred_fallthru
            _
          %252 = vnop
        $region36: #{conv_trans_m_forward.1} parent=31 // pred_fallthru
          _
      $region32: #{conv_trans_m_forward.1} parent=5 // pred_fallthru
        _
      %p253 = scmp.le.s32.totalorder 1, %s11
      %p254 = scmp.lt.s32.totalorder %s11, 9
      %p255 = pnand %p253, %p254
      %p256 = pneg %p255
      // Predicated region
      $region56: #{conv_trans_m_forward.1} parent=5 // pred_check
        _
      $region57: #{conv_trans_m_forward.1} parent=5 // pred_check_branch
        %258 = sbr.rel (%p255) target = $region59
      $region58: #{conv_trans_m_forward.1} parent=5 // pred_region
        %s259 = ssub.s32 %s11, 1
        %s260 = sand.u32 %s65, 1
        %s261 = sand.u32 %s65, 1
        %s262 = smul.addr %s261, 96
        %s263 = scalar_lea.vmem [#allocation7], %s262
        // Predicated region
        $region60: #{conv_trans_m_forward.1} parent=58 // pred_check
          %p264 = pneg %p78
        $region61: #{conv_trans_m_forward.1} parent=58 // pred_check_branch
          %266 = sbr.rel (%p264) target = $region63
        $region62: #{conv_trans_m_forward.1} parent=58 // pred_region
          _
        $region63: #{conv_trans_m_forward.1} parent=58 // pred_fallthru
          _
        %p267 = pneg %p44
        %p268 = pneg %p41
        %s269 = sand.u32 %s65, 1
        %s270 = sand.u32 %s65, 1
        %s271 = smul.addr %s270, 96
        %s272 = scalar_lea.vmem [#allocation7], %s271
        %p273 = pneg %p78
        %p274 = pneg %p75
        %p275 = pneg %p99
        %p276 = pneg %p96
        %p277 = pneg %p120
        %p278 = pneg %p117
        %p279 = pneg %p141
        %p280 = pneg %p138
        %p281 = pneg %p169
        %p282 = pneg %p166
        %s283 = smul.u32 %s21, %s20
        %s284 = smul.u32 4, %s283
        %p285 = scmp.lt.s32.totalorder %s284, 15
        %s286 = scalar_select %p285, %s284, 15
        %s287 = smul.addr %s286, 8
        %s288 = scalar_lea.vmem %s5, %s287
        %s289 = ssub.s32 1, %s20
        %s290 = smul.u32 %s21, %s289
        %s291 = smul.u32 %s20, 3
        %s292 = sadd.s32 %s290, %s291
        %s293 = smul.u32 4, %s292
        %s294 = smul.u32 %s21, %s20
        %s295 = smul.u32 4, %s294
        %p296 = scmp.lt.s32.totalorder %s295, 15
        %s297 = scalar_select %p296, %s295, 15
        %s298 = smul.addr %s297, 8
        %s299 = scalar_lea.vmem %s5, %s298
        %s300 = smul.u32 %s21, %s20
        %s301 = smul.u32 4, %s300
        %p303 = scmp.eq.s32.totalorder %s20, 0
        // Predicated region
        $region64: #{conv_trans_m_forward.1} parent=58 // pred_check
          %p304 = pneg %p303
        $region65: #{conv_trans_m_forward.1} parent=58 // pred_check_branch
          %306 = sbr.rel (%p304) target = $region67
        $region66: #{conv_trans_m_forward.1} parent=58 // pred_region
          %p307 = scmp.eq.s32.totalorder %s21, 0
          // Predicated region
          $region68: #{conv_trans_m_forward.1} parent=66 // pred_check
            %p308 = pneg %p307
          $region69: #{conv_trans_m_forward.1} parent=66 // pred_check_branch
            %310 = sbr.rel (%p308) target = $region71
          $region70: #{conv_trans_m_forward.1} parent=66 // pred_region
            %vm311 = vcmask 7168
            %312 = vst.msk [vmem:[#allocation3] sm:$0xff] %vm311, 0.0
            %313 = vst.msk [vmem:[#allocation4] sm:$0xff] %vm311, 0.0
          $region71: #{conv_trans_m_forward.1} parent=66 // pred_fallthru
            _
          %v314 = vld [vmem:[%s0] sm:$0xf]
          %v315 = vld [vmem:[%s263] sm:$0xff]
          %v316 = vld [vmem:[%s263 + $0x8] sm:$0xff]
          %v317 = vld [vmem:[%s263 + $0x10] sm:$0xff]
          %v318 = vld [vmem:[%s263 + $0x18] sm:$0xff]
          %v319 = vld [vmem:[%s263 + $0x20] sm:$0xff]
          %v320 = vld [vmem:[%s263 + $0x28] sm:$0xff]
          %v321 = vld [vmem:[%s263 + $0x30] sm:$0xff]
          %v322 = vld [vmem:[%s263 + $0x38] sm:$0xff]
          %v323 = vld [vmem:[%s263 + $0x40] sm:$0xff]
          %v324 = vld [vmem:[%s263 + $0x48] sm:$0xff]
          %v325 = vld [vmem:[%s263 + $0x50] sm:$0xff]
          %v326 = vld [vmem:[%s263 + $0x58] sm:$0xff]
          %v327 = vld [vmem:[%s2] sm:$0xff]
          %329 = vset.pattern.permute.xlu0 0
          %330 = vperm.xlu0 %329, %v327
          %v331 = vpop.permute.xlu0 %330
          %v345 = vunpack.c.l.b16 %v315
          %v346 = vunpack.c.h.b16 %v315
          %v347 = vunpack.c.l.b16 %v316
          %v348 = vunpack.c.h.b16 %v316
          %v349 = vunpack.c.l.b16 %v317
          %v350 = vunpack.c.h.b16 %v317
          %v351 = vunpack.c.l.b16 %v318
          %v352 = vunpack.c.h.b16 %v318
          %v353 = vunpack.c.l.b16 %v319
          %v354 = vunpack.c.h.b16 %v319
          %v355 = vunpack.c.l.b16 %v320
          %v356 = vunpack.c.h.b16 %v320
          %v357 = vunpack.c.l.b16 %v321
          %v358 = vunpack.c.h.b16 %v321
          %v359 = vunpack.c.l.b16 %v322
          %v360 = vunpack.c.h.b16 %v322
          %v361 = vunpack.c.l.b16 %v323
          %v362 = vunpack.c.h.b16 %v323
          %v363 = vunpack.c.l.b16 %v324
          %v364 = vunpack.c.h.b16 %v324
          %v365 = vunpack.c.l.b16 %v325
          %v366 = vunpack.c.h.b16 %v325
          %v367 = vunpack.c.l.b16 %v326
          %v368 = vunpack.c.h.b16 %v326
          %v369 = vpack.c.b16 %v349, %v345
          %v370 = vpack.c.b16 %v350, %v346
          %v371 = vpack.c.b16 %v351, %v347
          %v372 = vpack.c.b16 %v352, %v348
          %v373 = vpack.c.b16 %v357, %v353
          %v374 = vpack.c.b16 %v358, %v354
          %v375 = vpack.c.b16 %v359, %v355
          %v376 = vpack.c.b16 %v360, %v356
          %v377 = vpack.c.b16 %v365, %v361
          %v378 = vpack.c.b16 %v366, %v362
          %v379 = vpack.c.b16 %v367, %v363
          %v380 = vpack.c.b16 %v368, %v364
          %vm393 = vcmask 392192
          %v395 = vsel %vm393, %v314, 0
          %397 = vmatprep.subr.bf16.mxu0 %v370
          %398 = vmatpush1.bf16.msra.mxu0 %v369
          %399 = vmatprep.subr.bf16.mxu0 %v374
          %400 = vmatpush1.bf16.msra.mxu0 %v373
          %401 = vmatprep.subr.bf16.mxu0 %v378
          %402 = vmatpush1.bf16.msra.mxu0 %v377
          %403 = vmatprep.subr.bf16.mxu0 0
          %404 = vmatpush1.bf16.msra.mxu0 0
          %405 = vmatprep.subr.bf16.mxu0 0
          %406 = vmatpush1.bf16.msra.mxu0 0
          %407 = vmatprep.subr.bf16.mxu0 0
          %408 = vmatpush1.bf16.msra.mxu0 0
          %409 = vmatprep.subr.bf16.mxu0 0
          %410 = vmatpush1.bf16.msra.mxu0 0
          %411 = vmatprep.subr.bf16.mxu0 0
          %412 = vmatpush1.bf16.msra.mxu0 0
          %413 = vmatprep.subr.bf16.mxu0 0
          %414 = vmatpush1.bf16.msra.mxu0 0
          %415 = vmatprep.subr.bf16.mxu0 0
          %416 = vmatpush1.bf16.msra.mxu0 0
          %417 = vmatprep.subr.bf16.mxu0 0
          %418 = vmatpush1.bf16.msra.mxu0 0
          %419 = vmatprep.subr.bf16.mxu0 0
          %420 = vmatpush1.bf16.msra.mxu0 0
          %421 = vmatprep.subr.bf16.mxu0 0
          %422 = vmatpush1.bf16.msra.mxu0 0
          %423 = vmatprep.subr.bf16.mxu0 0
          %424 = vmatpush1.bf16.msra.mxu0 0
          %425 = vmatprep.subr.bf16.mxu0 0
          %426 = vmatpush1.bf16.msra.mxu0 0
          %427 = vmatprep.subr.bf16.mxu0 0
          %428 = vmatpush1.bf16.msra.mxu0 0
          %429 = vmatprep.mubr.bf16.mxu0 0
          %430 = vmatmul.mubr.bf16.gmra.mrb[0].mxu0 %v395
          %v431 = vpop.f32.mrb[0].mxu0
          %v432 = vadd.f32 %v331, %v431
          %v433 = vpop.f32.mrb[0].mxu0
          %v434 = vadd.f32 %v331, %v433
          %v435 = vpop.f32.mrb[0].mxu0
          %v436 = vpop.f32.mrb[0].mxu0
          %437 = vdwg.mxu0
          %438 = vmatprep.subr.bf16.mxu0 %v372
          %439 = vmatpush1.bf16.msra.mxu0 %v371
          %440 = vmatprep.subr.bf16.mxu0 %v376
          %441 = vmatpush1.bf16.msra.mxu0 %v375
          %442 = vmatprep.subr.bf16.mxu0 %v380
          %443 = vmatpush1.bf16.msra.mxu0 %v379
          %444 = vmatprep.subr.bf16.mxu0 0
          %445 = vmatpush1.bf16.msra.mxu0 0
          %446 = vmatprep.subr.bf16.mxu0 0
          %447 = vmatpush1.bf16.msra.mxu0 0
          %448 = vmatprep.subr.bf16.mxu0 0
          %449 = vmatpush1.bf16.msra.mxu0 0
          %450 = vmatprep.subr.bf16.mxu0 0
          %451 = vmatpush1.bf16.msra.mxu0 0
          %452 = vmatprep.subr.bf16.mxu0 0
          %453 = vmatpush1.bf16.msra.mxu0 0
          %454 = vmatprep.subr.bf16.mxu0 0
          %455 = vmatpush1.bf16.msra.mxu0 0
          %456 = vmatprep.subr.bf16.mxu0 0
          %457 = vmatpush1.bf16.msra.mxu0 0
          %458 = vmatprep.subr.bf16.mxu0 0
          %459 = vmatpush1.bf16.msra.mxu0 0
          %460 = vmatprep.subr.bf16.mxu0 0
          %461 = vmatpush1.bf16.msra.mxu0 0
          %462 = vmatprep.subr.bf16.mxu0 0
          %463 = vmatpush1.bf16.msra.mxu0 0
          %464 = vmatprep.subr.bf16.mxu0 0
          %465 = vmatpush1.bf16.msra.mxu0 0
          %466 = vmatprep.subr.bf16.mxu0 0
          %467 = vmatpush1.bf16.msra.mxu0 0
          %468 = vmatprep.subr.bf16.mxu0 0
          %469 = vmatpush1.bf16.msra.mxu0 0
          %470 = vmatprep.mubr.bf16.mxu0 0
          %471 = vmatmul.mubr.bf16.gmra.mrb[0].mxu0 %v395
          %v472 = vpop.f32.mrb[0].mxu0
          %v473 = vadd.f32 %v331, %v472
          %v474 = vpop.f32.mrb[0].mxu0
          %v475 = vadd.f32 %v331, %v474
          %v476 = vpop.f32.mrb[0].mxu0
          %v477 = vpop.f32.mrb[0].mxu0
          %478 = vdwg.mxu0
          %s479 = smul.u32 %s21, 4
          %s480 = smul.addr %s479, 8
          %s481 = scalar_lea.vmem [#allocation2], %s480
          %482 = vst [vmem:[%s481] sm:$0xff] %v432
          %483 = vst [vmem:[%s481 + $0x8] sm:$0xff] %v434
          %484 = vst [vmem:[%s481 + $0x10] sm:$0xff] %v473
          %485 = vst [vmem:[%s481 + $0x18] sm:$0xff] %v475
          %v486 = vld [vmem:[#allocation3] sm:$0xff]
          %v487 = vadd.f32 %v432, %v434
          %v488 = vadd.f32 %v487, %v473
          %v489 = vadd.f32 %v488, %v475
          %490 = vadd.xlane.f32.xlu0 %v489
          %v491 = vpop.xlane.xlu0 %490
          %v492 = vadd.f32 %v486, %v491
          %vm493 = vcmask 7168
          %494 = vst.msk [vmem:[#allocation3] sm:$0xff] %vm493, %v492
          %v495 = vld [vmem:[#allocation4] sm:$0xff]
          %v496 = vmul.f32 %v432, %v432
          %v497 = vmul.f32 %v434, %v434
          %v498 = vmul.f32 %v473, %v473
          %v499 = vmul.f32 %v475, %v475
          %v500 = vadd.f32 %v496, %v497
          %v501 = vadd.f32 %v500, %v498
          %v502 = vadd.f32 %v501, %v499
          %503 = vadd.xlane.f32.xlu0 %v502
          %v504 = vpop.xlane.xlu0 %503
          %v505 = vadd.f32 %v495, %v504
          %506 = vst.msk [vmem:[#allocation4] sm:$0xff] %vm493, %v505
          %p507 = scmp.eq.s32.totalorder %s21, 3
          // Predicated region
          $region72: #{conv_trans_m_forward.1} parent=66 // pred_check
            %p508 = pneg %p507
          $region73: #{conv_trans_m_forward.1} parent=66 // pred_check_branch
            %510 = sbr.rel (%p508) target = $region75
          $region74: #{conv_trans_m_forward.1} parent=66 // pred_region
            %v511 = vld [vmem:[%s2] sm:$0xff]
            %v512 = vld [vmem:[#allocation3] sm:$0xff]
            %v513 = vmul.f32 %v511, 126.0
            %v514 = vsub.f32 %v512, %v513
            %v515 = vmul.f32 %v514, 0.0005202914
            %v516 = vld [vmem:[#allocation4] sm:$0xff]
            %v517 = vmul.f32 %v513, %v511
            %v518 = vsub.f32 %v516, %v517
            %v519 = vmul.f32 %v518, 0.0005202914
            %v520 = vmul.f32 %v515, %v515
            %v521 = vsub.f32 %v519, %v520
            %v522 = vmax.f32 %v521, 0.0
            %v523 = vld [vmem:[%s3] sm:$0xff]
            %v524 = vadd.f32 %v522, 1e-05
            %v525 = vrsqrt.pop %v524
            %v526 = vmul.f32 %v523, %v525
            %527 = vst.msk [vmem:[#allocation5] sm:$0xff] %vm493, %v526
            %v528 = vld [vmem:[%s4] sm:$0xff]
            %v529 = vmul.f32 %v515, %v526
            %v530 = vsub.f32 %v528, %v529
            %531 = vst.msk [vmem:[#allocation6] sm:$0xff] %vm493, %v530
          $region75: #{conv_trans_m_forward.1} parent=66 // pred_fallthru
            _
        $region67: #{conv_trans_m_forward.1} parent=58 // pred_fallthru
          _
        %p532 = scmp.eq.s32.totalorder %s20, 1
        // Predicated region
        $region76: #{conv_trans_m_forward.1} parent=58 // pred_check
          %p533 = pneg %p532
        $region77: #{conv_trans_m_forward.1} parent=58 // pred_check_branch
          %535 = sbr.rel (%p533) target = $region79
        $region78: #{conv_trans_m_forward.1} parent=58 // pred_region
          %s536 = smul.u32 %s21, 4
          %s537 = smul.addr %s536, 8
          %s538 = scalar_lea.vmem [#allocation2], %s537
          %v539 = vld [vmem:[%s538] sm:$0xff]
          %v540 = vld [vmem:[%s538 + $0x8] sm:$0xff]
          %v541 = vld [vmem:[%s538 + $0x10] sm:$0xff]
          %v542 = vld [vmem:[%s538 + $0x18] sm:$0xff]
          %v543 = vld [vmem:[#allocation5] sm:$0xff]
          %545 = vset.pattern.permute.xlu0 0
          %546 = vperm.xlu0 %545, %v543
          %v547 = vpop.permute.xlu0 %546
          %v549 = vmul.f32 %v539, %v547
          %v550 = vmul.f32 %v540, %v547
          %v551 = vmul.f32 %v541, %v547
          %v552 = vmul.f32 %v542, %v547
          %v553 = vld [vmem:[#allocation6] sm:$0xff]
          %555 = vset.pattern.permute.xlu0 0
          %556 = vperm.xlu0 %555, %v553
          %v557 = vpop.permute.xlu0 %556
          %v559 = vadd.f32 %v549, %v557
          %v560 = vadd.f32 %v550, %v557
          %v561 = vadd.f32 %v551, %v557
          %v562 = vadd.f32 %v552, %v557
          %v563 = vmax.f32 %v559, 0.0
          %v564 = vmax.f32 %v560, 0.0
          %v565 = vmax.f32 %v561, 0.0
          %v566 = vmax.f32 %v562, 0.0
          %567 = vst [vmem:[%s299] sm:$0xff] %v563
          %568 = vst [vmem:[%s299 + $0x8] sm:$0xff] %v564
          %569 = vst [vmem:[%s299 + $0x10] sm:$0xff] %v565
          %570 = vst [vmem:[%s299 + $0x18] sm:$0xff] %v566
        $region79: #{conv_trans_m_forward.1} parent=58 // pred_fallthru
          _
        %s571 = smul.u32 %s21, %s20
        %s572 = smul.u32 4, %s571
        %p573 = scmp.lt.s32.totalorder %s572, 15
        %s574 = scalar_select %p573, %s572, 15
        %s575 = smul.addr %s574, 8
        %s576 = scalar_lea.vmem %s5, %s575
        // Predicated region
        $region80: #{conv_trans_m_forward.1} parent=58 // pred_check
          %p577 = pneg %p166
        $region81: #{conv_trans_m_forward.1} parent=58 // pred_check_branch
          %579 = sbr.rel (%p577) target = $region83
        $region82: #{conv_trans_m_forward.1} parent=58 // pred_region
          %s580 = smul.u32 %s21, %s20
          %s581 = smul.u32 4, %s580
        $region83: #{conv_trans_m_forward.1} parent=58 // pred_fallthru
          _
      $region59: #{conv_trans_m_forward.1} parent=5 // pred_fallthru
        _
      %p582 = scmp.le.s32.totalorder 2, %s11
      // Predicated region
      $region84: #{conv_trans_m_forward.1} parent=5 // pred_check
        %p583 = pneg %p582
      $region85: #{conv_trans_m_forward.1} parent=5 // pred_check_branch
        %585 = sbr.rel (%p583) target = $region87
      $region86: #{conv_trans_m_forward.1} parent=5 // pred_region
        %s586 = ssub.s32 %s11, 2
        // Predicated region
        $region88: #{conv_trans_m_forward.1} parent=86 // pred_check
          %p587 = pneg %p172
        $region89: #{conv_trans_m_forward.1} parent=86 // pred_check_branch
          %589 = sbr.rel (%p587) target = $region91
        $region90: #{conv_trans_m_forward.1} parent=86 // pred_region
          %s590 = smul.u32 %s23, %s22
          %s591 = smul.u32 4, %s590
          %p592 = scmp.lt.s32.totalorder %s591, 15
          %s593 = scalar_select %p592, %s591, 15
          %s594 = smul.addr %s593, 8
          %s595 = scalar_lea.vmem %s5, %s594
        $region91: #{conv_trans_m_forward.1} parent=86 // pred_fallthru
          _
      $region87: #{conv_trans_m_forward.1} parent=5 // pred_fallthru
        _
    $region6: #{conv_trans_m_forward.1} parent=1 // loop_footer
      %s15 = sadd.s32 1, %s11
    $region7: #{conv_trans_m_forward.1} parent=1 // loop_footer_branch
      %10 = sbr.rel target = $region3
    $region8: #{conv_trans_m_forward.1} parent=1 // loop_exit
      _

</llo_original>
